<compile_context>
chip_gen: v7x
topology: tpu7x:2x2x1
jax: 0.10.0
libtpu: 0.0.40
codegen_flags: <defaults>
</compile_context>

<pallas_src>
import jax
import jax.numpy as jnp
from jax.experimental import pallas as pl
from jax.experimental.pallas import tpu as pltpu


def _round_up(x, m):
    return ((x + m - 1) // m) * m


def _roe_kernel(inv_ref, um_ref, out_ref):
    um = um_ref[...]                              # (row_tile, N)
    inv_2dx = inv_ref[0].astype(um.dtype)         # keep chain in um's dtype
    # Periodic neighbours along the logical grid axis (last dim, width N).
    # concat-of-slices == jnp.roll; works for any N, no lane padding needed.
    ul = jnp.concatenate([um[:, -1:], um[:, :-1]], axis=1)   # um[i-1]
    ur = jnp.concatenate([um[:, 1:], um[:, :1]], axis=1)     # um[i+1]
    s_r = um + ur
    s_l = um + ul
    out = (jnp.minimum(s_r, 0.0) * (um - ur)
           + jnp.maximum(s_l, 0.0) * (ul - um)) * inv_2dx
    out_ref[...] = out.astype(out_ref.dtype)


def roe_pallas(um, dx, *, vmem_budget_bytes=8 << 20):
    """um: (B, C, N) array; returns the Roe flux with the same shape/dtype."""
    B, C, N = um.shape
    rows = B * C
    um2 = um.reshape(rows, N)            # fold (B, C) -> sublane axis (free)

    itemsize = um.dtype.itemsize
    sublane = {1: 32, 2: 16}.get(itemsize, 8)      # dtype-aware packing

    # VMEM budget: 2 pipeline buffers x (input + output) per tile.
    per_row_bytes = 4 * N * itemsize
    rows_budget = max(sublane,
                      (vmem_budget_bytes // per_row_bytes) // sublane * sublane)

    if rows <= rows_budget:
        if rows >= 2 * sublane and rows * N * itemsize >= (1 << 20):
            # Big enough: >=2 grid steps so v7x's two TensorCores share work.
            row_tile = _round_up(pl.cdiv(rows, 2), sublane)
        else:
            # Single full-dim block (exempt from the multiple-of-8 rule).
            row_tile = rows
    else:
        row_tile = rows_budget

    grid = (pl.cdiv(rows, row_tile),)

    inv_2dx = jnp.asarray([1.0 / (2.0 * dx)], dtype=jnp.float32)

    out = pl.pallas_call(
        _roe_kernel,
        out_shape=jax.ShapeDtypeStruct((rows, N), um.dtype),
        grid=grid,
        in_specs=[
            pl.BlockSpec(memory_space=pltpu.MemorySpace.SMEM),   # 1/(2*dx)
            pl.BlockSpec((row_tile, N), lambda i: (i, 0)),       # um tile
        ],
        out_specs=pl.BlockSpec((row_tile, N), lambda i: (i, 0)),
        compiler_params=pltpu.CompilerParams(
            dimension_semantics=("parallel",)),
    )(inv_2dx, um2)

    return out.reshape(B, C, N)


def roe_reference(um, dx):
    ul = jnp.concatenate([um[:, :, -1:], um[:, :, :-1]], axis=2)
    ur = jnp.concatenate([um[:, :, 1:], um[:, :, :1]], axis=2)
    Rur = (um + ur - jnp.abs(um + ur)) * (ur - um)
    Rul = (um + ul + jnp.abs(um + ul)) * (um - ul)
    return -(Rur + Rul) / (4.0 * dx)


if __name__ == "__main__":
    # Matches the generator script's grid: x in [-0.5, 0.5], 100 cells.
    grid_size = 100
    xe, xs = 0.5, -0.5
    dx = (xe - xs) / grid_size

    B, C, N = 2, 4, grid_size          # batch=2, channels=4, grid=100
    key = jax.random.PRNGKey(0)
    um = jax.random.normal(key, (B, C, N), dtype=jnp.float32)

    out = jax.block_until_ready(roe_pallas(um, dx))
    ref = roe_reference(um, dx)

    assert out.shape == (B, C, N) and out.dtype == um.dtype
    assert jnp.allclose(out, ref, atol=1e-5, rtol=1e-5), float(
        jnp.max(jnp.abs(out - ref)))

    print("KERNEL_OK")
</pallas_src>

<mosaic_0001>
module attributes {stable_mosaic.version = 11 : i64} {
  func.func @_roe_kernel(%arg0: i32, %arg1: memref<1xf32, #tpu.memory_space<smem>>, %arg2: memref<8x100xf32, #tpu.memory_space<vmem>>, %arg3: memref<8x100xf32, #tpu.memory_space<vmem>>) attributes {dimension_semantics = [#tpu.dimension_semantics<parallel>], iteration_bounds = array<i64: 1>, scalar_prefetch = 0 : i64, scratch_operands = 0 : i64, tpu.core_type = #tpu.core_type<tc>, window_params = [{transform_indices = @transform_0, window_bounds = array<i64: 1>}, {transform_indices = @transform_1, window_bounds = array<i64: 8, 100>}, {transform_indices = @transform_2, window_bounds = array<i64: 8, 100>}]} {
    %c0 = arith.constant 0 : index
    %c0_0 = arith.constant 0 : index
    %0 = vector.load %arg2[%c0, %c0_0] : memref<8x100xf32, #tpu.memory_space<vmem>>, vector<8x100xf32>
    %c0_1 = arith.constant 0 : index
    %1 = memref.load %arg1[%c0_1] : memref<1xf32, #tpu.memory_space<smem>>
    %2 = vector.extract_strided_slice %0 {offsets = [0, 99], sizes = [8, 1], strides = [1, 1]} : vector<8x100xf32> to vector<8x1xf32>
    %3 = vector.extract_strided_slice %0 {offsets = [0, 0], sizes = [8, 99], strides = [1, 1]} : vector<8x100xf32> to vector<8x99xf32>
    %4 = tpu.concatenate %2, %3 in 1 : vector<8x1xf32>, vector<8x99xf32> -> vector<8x100xf32>
    %5 = vector.extract_strided_slice %0 {offsets = [0, 1], sizes = [8, 99], strides = [1, 1]} : vector<8x100xf32> to vector<8x99xf32>
    %6 = vector.extract_strided_slice %0 {offsets = [0, 0], sizes = [8, 1], strides = [1, 1]} : vector<8x100xf32> to vector<8x1xf32>
    %7 = tpu.concatenate %5, %6 in 1 : vector<8x99xf32>, vector<8x1xf32> -> vector<8x100xf32>
    %8 = arith.addf %0, %7 : vector<8x100xf32>
    %9 = arith.addf %0, %4 : vector<8x100xf32>
    %cst = arith.constant 0.000000e+00 : f32
    %10 = vector.broadcast %cst : f32 to vector<8x100xf32>
    %11 = arith.minimumf %8, %10 : vector<8x100xf32>
    %12 = arith.subf %0, %7 : vector<8x100xf32>
    %13 = arith.mulf %11, %12 : vector<8x100xf32>
    %cst_2 = arith.constant 0.000000e+00 : f32
    %14 = vector.broadcast %cst_2 : f32 to vector<8x100xf32>
    %15 = arith.maximumf %9, %14 : vector<8x100xf32>
    %16 = arith.subf %4, %0 : vector<8x100xf32>
    %17 = arith.mulf %15, %16 : vector<8x100xf32>
    %18 = arith.addf %13, %17 : vector<8x100xf32>
    %19 = vector.broadcast %1 : f32 to vector<8x100xf32>
    %20 = arith.mulf %18, %19 : vector<8x100xf32>
    %c0_3 = arith.constant 0 : index
    %c0_4 = arith.constant 0 : index
    %21 = vector.load %arg3[%c0_3, %c0_4] : memref<8x100xf32, #tpu.memory_space<vmem>>, vector<8x100xf32>
    tpu.vector_store %arg3[%c0_3, %c0_4], %20 {strides = array<i32>} : memref<8x100xf32, #tpu.memory_space<vmem>>, vector<8x100xf32>,
    return
  }
  func.func @transform_0(%arg0: i32) -> i32 {
    %c0_i32 = arith.constant 0 : i32
    %c0_i32_0 = arith.constant 0 : i32
    return %c0_i32 : i32
  }
  func.func @transform_1(%arg0: i32) -> (i32, i32) {
    %c0_i32 = arith.constant 0 : i32
    %c0_i32_0 = arith.constant 0 : i32
    return %arg0, %c0_i32 : i32, i32
  }
  func.func @transform_2(%arg0: i32) -> (i32, i32) {
    %c0_i32 = arith.constant 0 : i32
    %c0_i32_0 = arith.constant 0 : i32
    return %arg0, %c0_i32 : i32, i32
  }
}

</mosaic_0001>

<llo_original>
// kernel: tpu_custom_call.1
$region0: #{tpu_custom_call.1}
  #allocation0 [shape = 'u32[]', space=smem, size = 0x4, offset = 0x4, fixed_abs, tag = 'smem constant byte address 0x4 - core index']
  #allocation1 [shape = 'u32[144,128]{1,0:T(1,128)}', space=vmem, size = 0x12000, scoped, tag = 'internal scratch']
  #allocation2 [shape = 'f32[1]{0:T(128)S(6)}', space=smem, size = 0x200, scoped, tag = 'scoped memory for tpu_custom_call.1']
  %s0 = inlined_call_operand.<no memory space> [shape: f32[1], index: 0, kind: input, shape index: {}]
  %s1 = inlined_call_operand.hbm [shape: f32[8,100], index: 1, kind: input, shape index: {}]
  %s2 = inlined_call_operand.hbm [shape: f32[8,100], index: 2, kind: output, shape index: {}]
  %s3 = sld [smem:[#allocation0]]
  $region22: #{tpu_custom_call.1} parent=0
    _
  %s5 = ssub.s32 1, %s3
  %s6 = scalar_select 0, %s5, %s3
  %7 = sst [smem:[#allocation2]] %s0
  $region1: #{tpu_custom_call.1} parent=0
    #allocation3 [shape = 'u8[4096]{0}', space=vmem, size = 0x1000, scoped, tag = 'input window, operand 1, single buffered']
    #allocation4 [shape = 's32[1]{0}', space=sflag, size = 0x4, scoped, tag = 'scoped memory for tpu_custom_call.1']
    #allocation5 [shape = 's32[1]{0}', space=sflag, size = 0x4, scoped, tag = 'scoped memory for tpu_custom_call.1']
    #allocation6 [shape = 'u8[4096]{0}', space=vmem, size = 0x1000, scoped, tag = 'output window, operand 0, single buffered']
    %8 = vsyncpa [#allocation4], 0
    %9 = vsyncpa [#allocation5], 0
    // Predicated region
    $region2: #{tpu_custom_call.1} parent=1 // pred_check
      _
    $region3: #{tpu_custom_call.1} parent=1 // pred_check_branch
      %11 = sbr.rel (0) target = $region5
    $region4: #{tpu_custom_call.1} parent=1 // pred_region
      _
    $region5: #{tpu_custom_call.1} parent=1 // pred_fallthru
      _
    // Predicated region
    $region6: #{tpu_custom_call.1} parent=1 // pred_check
      _
    $region7: #{tpu_custom_call.1} parent=1 // pred_check_branch
      %13 = sbr.rel (0) target = $region9
    $region8: #{tpu_custom_call.1} parent=1 // pred_region
      %s15 = ssub.s32 128, 128
      %16 = vsyncadd [#allocation4], %s15
      %s18 = sshll.u32 [#allocation3], 4
      %s19 = int_to_ptr.vmem [resolvable:$true] %s18
      %21 = dma.hbm_to_vmem [thread:$0]  %s1, 128, %s19, [#allocation4]
    $region9: #{tpu_custom_call.1} parent=1 // pred_fallthru
      _
    // Predicated region
    $region10: #{tpu_custom_call.1} parent=1 // pred_check
      _
    $region11: #{tpu_custom_call.1} parent=1 // pred_check_branch
      %23 = sbr.rel (0) target = $region13
    $region12: #{tpu_custom_call.1} parent=1 // pred_region
      %24 = dma.done [#allocation4], 128
    $region13: #{tpu_custom_call.1} parent=1 // pred_fallthru
      _
    %v25 = vld [vmem:[#allocation3] sm:$0xff]
    %s26 = sld [smem:[#allocation2]]
    %28 = vrot.lane.b32.xlu0 %v25, 29
    %v29 = vpop.permute.xlu0 %28
    %31 = vrot.lane.b32.xlu0 %v25, 1
    %v32 = vpop.permute.xlu0 %31
    %vm34 = vcmask 7168
    %v35 = vsel %vm34, %v29, %v32
    %36 = vrot.lane.b32.xlu0 %v25, 127
    %v37 = vpop.permute.xlu0 %36
    %39 = vrot.lane.b32.xlu0 %v25, 99
    %v40 = vpop.permute.xlu0 %39
    %vm42 = vcmask 809984
    %v43 = vsel %vm42, %v37, %v40
    %v44 = vadd.f32 %v25, %v43
    %v45 = vadd.f32 %v25, %v35
    %v46 = vmin.f32 %v44, 0.0
    %v47 = vsub.f32 %v25, %v43
    %v48 = vmul.f32 %v46, %v47
    %v49 = vmax.f32 %v45, 0.0
    %v50 = vsub.f32 %v35, %v25
    %v51 = vmul.f32 %v49, %v50
    %v52 = vadd.f32 %v48, %v51
    %v53 = vstv %s26
    %v54 = vmul.f32 %v52, %v53
    %vm55 = vcmask 818176
    %56 = vst.msk [vmem:[#allocation6] sm:$0xff] %vm55, %v54
    // Predicated region
    $region14: #{tpu_custom_call.1} parent=1 // pred_check
      _
    $region15: #{tpu_custom_call.1} parent=1 // pred_check_branch
      %58 = sbr.rel (0) target = $region17
    $region16: #{tpu_custom_call.1} parent=1 // pred_region
      %s60 = ssub.s32 128, 128
      %61 = vsyncadd [#allocation5], %s60
      %s63 = sshll.u32 [#allocation6], 4
      %s64 = int_to_ptr.vmem [resolvable:$true] %s63
      %66 = dma.vmem_to_hbm [thread:$0]  %s64, 128, %s2, [#allocation5]
    $region17: #{tpu_custom_call.1} parent=1 // pred_fallthru
      _
    // Predicated region
    $region18: #{tpu_custom_call.1} parent=1 // pred_check
      _
    $region19: #{tpu_custom_call.1} parent=1 // pred_check_branch
      %68 = sbr.rel (0) target = $region21
    $region20: #{tpu_custom_call.1} parent=1 // pred_region
      %69 = dma.done [#allocation5], 128
    $region21: #{tpu_custom_call.1} parent=1 // pred_fallthru
      _
    %70 = vsyncpa [#allocation4], 1
    %71 = vsyncpa [#allocation5], 1

</llo_original>
